<compile_context>
chip_gen: v6e
topology: v6e:2x2x1
jax: 0.10.0
libtpu: 0.0.40
codegen_flags: <defaults>
</compile_context>

<pallas_src>
import functools

import jax
import jax.numpy as jnp
from jax.experimental import pallas as pl
from jax.experimental.pallas import tpu as pltpu


_BCE_W = 1.0
_REG_W = 0.2
_RNK_W = 1.0


def _vmem_budget():
    """Per-slab byte cap for the paired-logits row slab and the scoped-VMEM limit,
    keyed off the physical VMEM of the current chip generation (64 MiB on v7x,
    128 MiB on v5e/v6e)."""
    cap = 64 * 1024 * 1024
    try:
        info = pltpu.get_tpu_info()
        cap = int(getattr(info, "vmem_capacity_bytes", cap))
    except Exception:
        pass
    # The paired slab is double-buffered; leave room for residents + overheads.
    slab_cap = max(4 * 1024 * 1024, min(16 * 1024 * 1024, cap // 5))
    vmem_limit = int(min(cap - 8 * 1024 * 1024, (cap * 3) // 4))
    return slab_cap, vmem_limit


def _choose_row_tile(n_rows, n_cols, itemsize, byte_cap):
    """Row-slab size for the (N, N) paired matrix: as big as the per-buffer byte
    budget allows (no artificial row cap); multiple of 8 unless it covers the
    whole matrix (full-dim blocks have no (8,128) constraint)."""
    if n_rows <= 8:
        return n_rows
    cap_rows = max(8, byte_cap // max(1, n_cols * itemsize))
    tm = min(n_rows, cap_rows)
    tm = max(8, (tm // 8) * 8)
    return n_rows if tm >= n_rows else tm


def _scalar_terms(yp_ref, yt_ref, n, use_bce, use_reg):
    """O(N) bce + regression terms from the sublane-dense (R, 128) slabs."""
    yp = yp_ref[...].astype(jnp.float32)
    yt = yt_ref[...].astype(jnp.float32)
    rows = jax.lax.broadcasted_iota(jnp.int32, yp.shape, 0)
    cols = jax.lax.broadcasted_iota(jnp.int32, yp.shape, 1)
    valid = (rows * 128 + cols) < n
    total = jnp.zeros((1, 1), jnp.float32)
    if use_bce:
        # BCEWithLogits, target z = (yt != 0):  max(x,0) - x*z + log1p(exp(-|x|));
        # the x*z product is fused into the select.
        xz = jnp.where(yt != 0.0, yp, 0.0)
        per_b = jnp.maximum(yp, 0.0) - xz + jnp.log1p(jnp.exp(-jnp.abs(yp)))
        per_b = jnp.where(valid, per_b, 0.0)
        total = total + jnp.float32(_BCE_W / n) * jnp.sum(per_b)
    if use_reg:
        d = yp - yt
        ad = jnp.abs(d)
        per_r = jnp.where(ad < 1.0, 0.5 * d * d, ad - 0.5)  # smooth_l1, beta=1
        per_r = jnp.where(valid, per_r, 0.0)
        total = total + jnp.float32(_REG_W) * jnp.log1p(jnp.sum(per_r) / jnp.float32(n))
    return total


def _make_rank_kernel(n, tm, half_steps, use_bce, use_reg):
    inv_n2 = 1.0 / (float(n) * float(n))

    def kernel(yp_ref, yt_ref, yt_col_ref, yt_row_ref, paired_ref, out_ref, acc_ref):
        c = pl.program_id(0)          # TensorCore split (outer, "parallel")
        i = pl.program_id(1)          # row-slab step (inner, "arbitrary")
        last = pl.num_programs(1) - 1

        @pl.when(i == 0)
        def _init():
            acc_ref[...] = jnp.zeros_like(acc_ref)

        # (tm, N) row slab of the paired logits; f32 upcast happens in-kernel so
        # the HBM->VMEM DMA moves the native (possibly bf16) dtype.
        x = paired_ref[...].astype(jnp.float32)
        yt_col = yt_col_ref[...].astype(jnp.float32)      # (tm, 1)
        yt_row = yt_row_ref[...].astype(jnp.float32)      # (1, N)
        # BCEWithLogits with target z = (yt_col - yt_row > 0); x*z fused into the
        # select so no (tm, N) z temporary is materialized.
        xz = jnp.where(yt_col > yt_row, x, 0.0)
        per = jnp.maximum(x, 0.0) - xz + jnp.log1p(jnp.exp(-jnp.abs(x)))
        # Lane-axis (XLU) reduction first, then the ragged / duplicate-block row
        # mask acts only on the (tm, 1) row sums (garbage rows are whole rows,
        # so their sums are discarded in full).
        per_row = jnp.sum(per, axis=1, keepdims=True)      # (tm, 1)
        blk = c * half_steps + i                           # logical (unclamped) block
        row_ids = blk * tm + jax.lax.broadcasted_iota(jnp.int32, per_row.shape, 0)
        per_row = jnp.where(row_ids < n, per_row, 0.0)
        # Pre-scale each tile by 1/N^2 so the running f32 sum stays O(1).
        acc_ref[...] += jnp.float32(_RNK_W * inv_n2) * jnp.sum(per_row)

        @pl.when(i == last)
        def _finalize():
            total = acc_ref[...]
            if use_bce or use_reg:
                # Fold the O(N) terms in exactly once (split 0 only).
                scalar = _scalar_terms(yp_ref, yt_ref, n, use_bce, use_reg)
                total = total + jnp.where(c == 0, 1.0, 0.0) * scalar
            out_ref[...] = total.reshape(1, 1, 1)

    return kernel


def _make_scalar_kernel(n, use_bce, use_reg):
    def kernel(yp_ref, yt_ref, out_ref):
        out_ref[...] = _scalar_terms(yp_ref, yt_ref, n, use_bce, use_reg)
    return kernel


@functools.partial(jax.jit, static_argnames=("loss_components", "row_tile"))
def clip_adapter_loss_v2(image_features, text_features, logit_scale,
                         adapter_logits, adapter_targets, adapter_paired_logits,
                         loss_components=("rank",), row_tile=None):
    """Returns (clip_loss, adapter_loss) exactly like ClipAdapterLossV2.forward."""
    del image_features, text_features, logit_scale  # clip_loss is hard-coded to 0.0
    clip_loss = jnp.float32(0.0)

    use_bce = "bce" in loss_components
    use_rank = "rank" in loss_components
    use_reg = "regression" in loss_components

    y_trues = adapter_targets.reshape(-1)          # (N,), native dtype
    y_preds = adapter_logits[:, 0].reshape(-1)     # (N,), native dtype
    n = y_trues.shape[0]

    # Sublane-dense (R, 128) slabs for the O(N) bce/regression terms
    # (zero padding, masked in-kernel).
    r = max(1, -(-n // 128))
    pad = r * 128 - n
    yp2 = jnp.pad(y_preds, (0, pad)).reshape(r, 128)
    yt2 = jnp.pad(y_trues, (0, pad)).reshape(r, 128)

    if not use_rank:
        if not (use_bce or use_reg):
            return clip_loss, jnp.float32(0.0)
        # No paired-logits DMA at all on this path: one tiny single-step call.
        out = pl.pallas_call(
            _make_scalar_kernel(n, use_bce, use_reg),
            out_shape=jax.ShapeDtypeStruct((1, 1), jnp.float32),
        )(yp2, yt2)
        return clip_loss, out[0, 0]

    # ---- rank path: tile the (N, N) paired-logits matrix in row slabs ----
    paired = adapter_paired_logits.reshape(n, n)   # native dtype through the DMA
    yt_col = y_trues.reshape(n, 1)
    yt_row = y_trues.reshape(1, n)

    slab_cap, vmem_limit = _vmem_budget()
    if row_tile is not None:
        tm = n if int(row_tile) >= n else max(8, (int(row_tile) // 8) * 8)
    else:
        tm = _choose_row_tile(n, n, paired.dtype.itemsize, slab_cap)

    total_steps = -(-n // tm)
    # Outer "parallel" axis of size 2 lets the two v7x TensorCores each own half
    # of the row slabs (pure sequential no-op on single-core v5e/v6e).
    n_splits = 2 if total_steps >= 2 else 1
    half_steps = -(-total_steps // n_splits)
    grid = (n_splits, half_steps)

    def row_block(c, i):
        # Clamp the block index for the (rare) duplicate step of an uneven split;
        # its rows are fully discarded by the in-kernel row mask.
        return (jnp.minimum(c * half_steps + i, total_steps - 1), 0)

    kernel = _make_rank_kernel(n, tm, half_steps, use_bce, use_reg)

    cost = pl.CostEstimate(
        flops=7 * n * n + 24 * n,
        transcendentals=2 * n * n + 2 * n,
        bytes_accessed=paired.size * paired.dtype.itemsize
        + (yp2.size + yt2.size) * 4 + 2 * n * y_trues.dtype.itemsize + 8,
    )

    out = pl.pallas_call(
        kernel,
        out_shape=jax.ShapeDtypeStruct((n_splits, 1, 1), jnp.float32),
        grid_spec=pltpu.PrefetchScalarGridSpec(
            num_scalar_prefetch=0,
            grid=grid,
            in_specs=[
                pl.BlockSpec((r, 128), lambda c, i: (0, 0)),   # y_preds slab (resident)
                pl.BlockSpec((r, 128), lambda c, i: (0, 0)),   # y_trues slab (resident)
                pl.BlockSpec((tm, 1), row_block),              # y_trues column tile
                pl.BlockSpec((1, n), lambda c, i: (0, 0)),     # y_trues row (resident)
                pl.BlockSpec((tm, n), row_block),              # paired logits row slab (pipelined)
            ],
            out_specs=pl.BlockSpec((1, 1, 1), lambda c, i: (c, 0, 0)),
            scratch_shapes=[pltpu.VMEM((1, 1), jnp.float32)],  # per-split running rank sum
        ),
        compiler_params=pltpu.CompilerParams(
            dimension_semantics=("parallel", "arbitrary"),
            vmem_limit_bytes=vmem_limit,
        ),
        cost_estimate=cost,
    )(yp2, yt2, yt_col, yt_row, paired)

    adapter_loss = jnp.sum(out)
    # TODO(synk): PyTorch branch prints a host-side NaN debug dump on NaN loss; not replicated.
    return clip_loss, adapter_loss


def _reference(adapter_logits, adapter_targets, adapter_paired_logits, loss_components):
    # pure-JAX reference mirroring the PyTorch module
    y_trues = adapter_targets.reshape(-1).astype(jnp.float32)
    y_preds = adapter_logits[:, 0].reshape(-1).astype(jnp.float32)

    def bce_with_logits(x, z):
        return jnp.mean(jnp.maximum(x, 0.0) - x * z + jnp.log1p(jnp.exp(-jnp.abs(x))))

    bce = bce_with_logits(y_preds, jnp.where(y_trues == 0.0, 0.0, 1.0)) \
        if "bce" in loss_components else 0.0
    if "rank" in loss_components:
        pair = (y_trues[:, None] - y_trues[None, :]).reshape(-1)
        rank = bce_with_logits(adapter_paired_logits.reshape(-1).astype(jnp.float32),
                               jnp.where(pair > 0.0, 1.0, 0.0))
    else:
        rank = 0.0
    if "regression" in loss_components:
        d = y_preds - y_trues
        ad = jnp.abs(d)
        sl1 = jnp.mean(jnp.where(ad < 1.0, 0.5 * d * d, ad - 0.5))
        reg = jnp.log(sl1 + 1.0)
    else:
        reg = 0.0
    return 1.0 * bce + 0.2 * reg + 1.0 * rank


def _run_case(key, n, d, comps, row_tile=None):
    k1, k2, k3, k4, k5 = jax.random.split(key, 5)
    image_features = jax.random.normal(k1, (n, d), jnp.float32)
    text_features = jax.random.normal(k2, (n, d), jnp.float32)
    logit_scale = jnp.float32(100.0)
    adapter_logits = jax.random.normal(k3, (n, 2), jnp.float32)
    # targets include exact zeros to exercise the (y_trues == 0) branch
    adapter_targets = jax.random.randint(k4, (n, 1), 0, 4).astype(jnp.float32) * 0.5
    adapter_paired_logits = jax.random.normal(k5, (n * n, 1), jnp.float32)

    clip_loss, adapter_loss = clip_adapter_loss_v2(
        image_features, text_features, logit_scale,
        adapter_logits, adapter_targets, adapter_paired_logits,
        loss_components=comps, row_tile=row_tile,
    )
    jax.block_until_ready((clip_loss, adapter_loss))

    ref = _reference(adapter_logits, adapter_targets, adapter_paired_logits, comps)
    assert jnp.allclose(clip_loss, 0.0)
    assert jnp.allclose(adapter_loss, ref, rtol=1e-5, atol=1e-5), (n, comps, adapter_loss, ref)


if __name__ == "__main__":
    key = jax.random.PRNGKey(0)
    k_a, k_b, k_c, k_d = jax.random.split(key, 4)

    # all three components, single-tile path
    _run_case(k_a, n=8, d=32, comps=("bce", "rank", "regression"))
    # all three components, multi-tile grid + 2-way core split with a masked ragged
    # boundary tile and a clamped duplicate step (N=20, tm=8 -> grid (2, 2))
    _run_case(k_b, n=20, d=32, comps=("bce", "rank", "regression"), row_tile=8)
    # default module config: rank only
    _run_case(k_c, n=8, d=32, comps=("rank",))
    # no-rank path: bce + regression only (paired logits never DMA'd)
    _run_case(k_d, n=8, d=32, comps=("bce", "regression"))

    print("KERNEL_OK")
</pallas_src>

<mosaic_0001>
module attributes {stable_mosaic.version = 11 : i64} {
  func.func @kernel(%arg0: i32, %arg1: i32, %arg2: memref<1x128xf32, #tpu.memory_space<vmem>>, %arg3: memref<1x128xf32, #tpu.memory_space<vmem>>, %arg4: memref<8x1xf32, #tpu.memory_space<vmem>>, %arg5: memref<1x8xf32, #tpu.memory_space<vmem>>, %arg6: memref<8x8xf32, #tpu.memory_space<vmem>>, %arg7: memref<1x1x1xf32, #tpu.memory_space<vmem>>, %arg8: memref<1x1xf32, #tpu.memory_space<vmem>>) attributes {dimension_semantics = [#tpu.dimension_semantics<parallel>, #tpu.dimension_semantics<arbitrary>], iteration_bounds = array<i64: 1, 1>, scalar_prefetch = 0 : i64, scratch_operands = 1 : i64, tpu.core_type = #tpu.core_type<tc>, window_params = [{pipeline_mode = #tpu.pipeline_mode<synchronous>, transform_indices = @transform_0, window_bounds = array<i64: 1, 128>}, {pipeline_mode = #tpu.pipeline_mode<synchronous>, transform_indices = @transform_1, window_bounds = array<i64: 1, 128>}, {transform_indices = @transform_2, window_bounds = array<i64: 8, 1>}, {pipeline_mode = #tpu.pipeline_mode<synchronous>, transform_indices = @transform_3, window_bounds = array<i64: 1, 8>}, {transform_indices = @transform_4, window_bounds = array<i64: 8, 8>}, {transform_indices = @transform_5, window_bounds = array<i64: 1, 1, 1>}]} {
    %c0_i32 = arith.constant 0 : i32
    %0 = arith.cmpi eq, %arg1, %c0_i32 : i32
    %1 = arith.extui %0 : i1 to i32
    %c0_i32_0 = arith.constant 0 : i32
    %2 = arith.cmpi ne, %1, %c0_i32_0 : i32
    scf.if %2 {
      %cst_19 = arith.constant 0.000000e+00 : f32
      %44 = vector.broadcast %cst_19 : f32 to vector<1x1xf32>
      %c0_20 = arith.constant 0 : index
      %c0_21 = arith.constant 0 : index
      %45 = vector.load %arg8[%c0_20, %c0_21] : memref<1x1xf32, #tpu.memory_space<vmem>>, vector<1x1xf32>
      tpu.vector_store %arg8[%c0_20, %c0_21], %44 {strides = array<i32>} : memref<1x1xf32, #tpu.memory_space<vmem>>, vector<1x1xf32>,
    } else {
    }
    %c0 = arith.constant 0 : index
    %c0_1 = arith.constant 0 : index
    %3 = vector.load %arg6[%c0, %c0_1] : memref<8x8xf32, #tpu.memory_space<vmem>>, vector<8x8xf32>
    %c0_2 = arith.constant 0 : index
    %c0_3 = arith.constant 0 : index
    %4 = vector.load %arg4[%c0_2, %c0_3] : memref<8x1xf32, #tpu.memory_space<vmem>>, vector<8x1xf32>
    %c0_4 = arith.constant 0 : index
    %c0_5 = arith.constant 0 : index
    %5 = vector.load %arg5[%c0_4, %c0_5] : memref<1x8xf32, #tpu.memory_space<vmem>>, vector<1x8xf32>
    %6 = vector.broadcast %4 : vector<8x1xf32> to vector<8x8xf32>
    %7 = vector.broadcast %5 : vector<1x8xf32> to vector<8x8xf32>
    %8 = arith.cmpf ogt, %6, %7 : vector<8x8xf32>
    %cst = arith.constant 0.000000e+00 : f32
    %9 = vector.broadcast %cst : f32 to vector<8x8xf32>
    %10 = arith.select %8, %3, %9 : vector<8x8xi1>, vector<8x8xf32>
    %cst_6 = arith.constant 0.000000e+00 : f32
    %11 = vector.broadcast %cst_6 : f32 to vector<8x8xf32>
    %12 = arith.maximumf %3, %11 : vector<8x8xf32>
    %13 = arith.subf %12, %10 : vector<8x8xf32>
    %14 = math.absf %3 : vector<8x8xf32>
    %cst_7 = arith.constant 0.000000e+00 : f32
    %15 = vector.broadcast %cst_7 : f32 to vector<8x8xf32>
    %16 = arith.subf %15, %14 : vector<8x8xf32>
    %17 = math.exp %16 : vector<8x8xf32>
    %18 = math.log1p %17 : vector<8x8xf32>
    %19 = arith.addf %13, %18 : vector<8x8xf32>
    %cst_8 = arith.constant dense<0.000000e+00> : vector<8xf32>
    %20 = vector.multi_reduction <add>, %19, %cst_8 [1] : vector<8x8xf32> to vector<8xf32>
    %21 = vector.shape_cast %20 : vector<8xf32> to vector<8x1xf32>
    %c1_i32 = arith.constant 1 : i32
    %22 = arith.muli %arg0, %c1_i32 : i32
    %23 = arith.addi %22, %arg1 : i32
    %c8_i32 = arith.constant 8 : i32
    %24 = arith.muli %23, %c8_i32 : i32
    %25 = tpu.iota {dimensions = array<i32: 0>} : vector<8x1xi32>
    %26 = vector.broadcast %24 : i32 to vector<8x1xi32>
    %27 = arith.addi %26, %25 : vector<8x1xi32>
    %c8_i32_9 = arith.constant 8 : i32
    %28 = vector.broadcast %c8_i32_9 : i32 to vector<8x1xi32>
    %29 = arith.cmpi slt, %27, %28 : vector<8x1xi32>
    %cst_10 = arith.constant 0.000000e+00 : f32
    %30 = vector.broadcast %cst_10 : f32 to vector<8x1xf32>
    %31 = arith.select %29, %21, %30 : vector<8x1xi1>, vector<8x1xf32>
    %c0_11 = arith.constant 0 : index
    %c0_12 = arith.constant 0 : index
    %32 = vector.load %arg8[%c0_11, %c0_12] : memref<1x1xf32, #tpu.memory_space<vmem>>, vector<1x1xf32>
    %33 = vector.shape_cast %31 : vector<8x1xf32> to vector<1x8x1xf32>
    %cst_13 = arith.constant dense<0.000000e+00> : vector<1xf32>
    %34 = vector.multi_reduction <add>, %33, %cst_13 [1, 2] : vector<1x8x1xf32> to vector<1xf32>
    %35 = vector.shape_cast %34 : vector<1xf32> to vector<1x1x1xf32>
    %36 = vector.extract %35[0, 0, 0] : f32 from vector<1x1x1xf32>
    %cst_14 = arith.constant 1.562500e-02 : f32
    %37 = arith.mulf %cst_14, %36 : f32
    %38 = vector.broadcast %37 : f32 to vector<1x1xf32>
    %39 = arith.addf %32, %38 : vector<1x1xf32>
    %c0_15 = arith.constant 0 : index
    %c0_16 = arith.constant 0 : index
    %40 = vector.load %arg8[%c0_15, %c0_16] : memref<1x1xf32, #tpu.memory_space<vmem>>, vector<1x1xf32>
    tpu.vector_store %arg8[%c0_15, %c0_16], %39 {strides = array<i32>} : memref<1x1xf32, #tpu.memory_space<vmem>>, vector<1x1xf32>,
    %c0_i32_17 = arith.constant 0 : i32
    %41 = arith.cmpi eq, %arg1, %c0_i32_17 : i32
    %42 = arith.extui %41 : i1 to i32
    %c0_i32_18 = arith.constant 0 : i32
    %43 = arith.cmpi ne, %42, %c0_i32_18 : i32
    scf.if %43 {
      %c0_19 = arith.constant 0 : index
      %c0_20 = arith.constant 0 : index
      %44 = vector.load %arg8[%c0_19, %c0_20] : memref<1x1xf32, #tpu.memory_space<vmem>>, vector<1x1xf32>
      %c0_21 = arith.constant 0 : index
      %c0_22 = arith.constant 0 : index
      %45 = vector.load %arg2[%c0_21, %c0_22] : memref<1x128xf32, #tpu.memory_space<vmem>>, vector<1x128xf32>
      %c0_23 = arith.constant 0 : index
      %c0_24 = arith.constant 0 : index
      %46 = vector.load %arg3[%c0_23, %c0_24] : memref<1x128xf32, #tpu.memory_space<vmem>>, vector<1x128xf32>
      %47 = tpu.iota {dimensions = array<i32: 0>} : vector<1x128xi32>
      %48 = tpu.iota {dimensions = array<i32: 1>} : vector<1x128xi32>
      %c128_i32 = arith.constant 128 : i32
      %49 = vector.broadcast %c128_i32 : i32 to vector<1x128xi32>
      %50 = arith.muli %47, %49 : vector<1x128xi32>
      %51 = arith.addi %50, %48 : vector<1x128xi32>
      %c8_i32_25 = arith.constant 8 : i32
      %52 = vector.broadcast %c8_i32_25 : i32 to vector<1x128xi32>
      %53 = arith.cmpi slt, %51, %52 : vector<1x128xi32>
      %cst_26 = arith.constant 0.000000e+00 : f32
      %54 = vector.broadcast %cst_26 : f32 to vector<1x1xf32>
      %cst_27 = arith.constant 0.000000e+00 : f32
      %55 = vector.broadcast %cst_27 : f32 to vector<1x128xf32>
      %56 = arith.cmpf one, %46, %55 : vector<1x128xf32>
      %cst_28 = arith.constant 0.000000e+00 : f32
      %57 = vector.broadcast %cst_28 : f32 to vector<1x128xf32>
      %58 = arith.select %56, %45, %57 : vector<1x128xi1>, vector<1x128xf32>
      %cst_29 = arith.constant 0.000000e+00 : f32
      %59 = vector.broadcast %cst_29 : f32 to vector<1x128xf32>
      %60 = arith.maximumf %45, %59 : vector<1x128xf32>
      %61 = arith.subf %60, %58 : vector<1x128xf32>
      %62 = math.absf %45 : vector<1x128xf32>
      %cst_30 = arith.constant 0.000000e+00 : f32
      %63 = vector.broadcast %cst_30 : f32 to vector<1x128xf32>
      %64 = arith.subf %63, %62 : vector<1x128xf32>
      %65 = math.exp %64 : vector<1x128xf32>
      %66 = math.log1p %65 : vector<1x128xf32>
      %67 = arith.addf %61, %66 : vector<1x128xf32>
      %cst_31 = arith.constant 0.000000e+00 : f32
      %68 = vector.broadcast %cst_31 : f32 to vector<1x128xf32>
      %69 = arith.select %53, %67, %68 : vector<1x128xi1>, vector<1x128xf32>
      %70 = vector.shape_cast %69 : vector<1x128xf32> to vector<1x1x128xf32>
      %cst_32 = arith.constant dense<0.000000e+00> : vector<1xf32>
      %71 = vector.multi_reduction <add>, %70, %cst_32 [1, 2] : vector<1x1x128xf32> to vector<1xf32>
      %72 = vector.shape_cast %71 : vector<1xf32> to vector<1x1x1xf32>
      %73 = vector.extract %72[0, 0, 0] : f32 from vector<1x1x1xf32>
      %cst_33 = arith.constant 1.250000e-01 : f32
      %74 = arith.mulf %cst_33, %73 : f32
      %75 = vector.broadcast %74 : f32 to vector<1x1xf32>
      %76 = arith.addf %54, %75 : vector<1x1xf32>
      %77 = arith.subf %45, %46 : vector<1x128xf32>
      %78 = math.absf %77 : vector<1x128xf32>
      %cst_34 = arith.constant 1.000000e+00 : f32
      %79 = vector.broadcast %cst_34 : f32 to vector<1x128xf32>
      %80 = arith.cmpf olt, %78, %79 : vector<1x128xf32>
      %cst_35 = arith.constant 5.000000e-01 : f32
      %81 = vector.broadcast %cst_35 : f32 to vector<1x128xf32>
      %82 = arith.mulf %81, %77 : vector<1x128xf32>
      %83 = arith.mulf %82, %77 : vector<1x128xf32>
      %cst_36 = arith.constant 5.000000e-01 : f32
      %84 = vector.broadcast %cst_36 : f32 to vector<1x128xf32>
      %85 = arith.subf %78, %84 : vector<1x128xf32>
      %86 = arith.select %80, %83, %85 : vector<1x128xi1>, vector<1x128xf32>
      %cst_37 = arith.constant 0.000000e+00 : f32
      %87 = vector.broadcast %cst_37 : f32 to vector<1x128xf32>
      %88 = arith.select %53, %86, %87 : vector<1x128xi1>, vector<1x128xf32>
      %89 = vector.shape_cast %88 : vector<1x128xf32> to vector<1x1x128xf32>
      %cst_38 = arith.constant dense<0.000000e+00> : vector<1xf32>
      %90 = vector.multi_reduction <add>, %89, %cst_38 [1, 2] : vector<1x1x128xf32> to vector<1xf32>
      %91 = vector.shape_cast %90 : vector<1xf32> to vector<1x1x1xf32>
      %92 = vector.extract %91[0, 0, 0] : f32 from vector<1x1x1xf32>
      %cst_39 = arith.constant 8.000000e+00 : f32
      %93 = arith.divf %92, %cst_39 : f32
      %94 = math.log1p %93 : f32
      %cst_40 = arith.constant 2.000000e-01 : f32
      %95 = arith.mulf %cst_40, %94 : f32
      %96 = vector.broadcast %95 : f32 to vector<1x1xf32>
      %97 = arith.addf %76, %96 : vector<1x1xf32>
      %c0_i32_41 = arith.constant 0 : i32
      %98 = arith.cmpi eq, %arg0, %c0_i32_41 : i32
      %cst_42 = arith.constant 1.000000e+00 : f32
      %cst_43 = arith.constant 0.000000e+00 : f32
      %99 = arith.select %98, %cst_42, %cst_43 : f32
      %100 = vector.broadcast %99 : f32 to vector<1x1xf32>
      %101 = arith.mulf %100, %97 : vector<1x1xf32>
      %102 = arith.addf %44, %101 : vector<1x1xf32>
      %103 = vector.shape_cast %102 : vector<1x1xf32> to vector<1x1x1xf32>
      %c0_44 = arith.constant 0 : index
      %c0_45 = arith.constant 0 : index
      %c0_46 = arith.constant 0 : index
      %104 = vector.load %arg7[%c0_44, %c0_45, %c0_46] : memref<1x1x1xf32, #tpu.memory_space<vmem>>, vector<1x1x1xf32>
      tpu.vector_store %arg7[%c0_44, %c0_45, %c0_46], %103 {strides = array<i32>} : memref<1x1x1xf32, #tpu.memory_space<vmem>>, vector<1x1x1xf32>,
    } else {
    }
    return
  }
  func.func @transform_0(%arg0: i32, %arg1: i32) -> (i32, i32) {
    %c0_i32 = arith.constant 0 : i32
    %c0_i32_0 = arith.constant 0 : i32
    %c0_i32_1 = arith.constant 0 : i32
    return %c0_i32, %c0_i32_0 : i32, i32
  }
  func.func @transform_1(%arg0: i32, %arg1: i32) -> (i32, i32) {
    %c0_i32 = arith.constant 0 : i32
    %c0_i32_0 = arith.constant 0 : i32
    %c0_i32_1 = arith.constant 0 : i32
    return %c0_i32, %c0_i32_0 : i32, i32
  }
  func.func @transform_2(%arg0: i32, %arg1: i32) -> (i32, i32) {
    %c1_i32 = arith.constant 1 : i32
    %0 = arith.muli %arg0, %c1_i32 : i32
    %1 = arith.addi %0, %arg1 : i32
    %c0_i32 = arith.constant 0 : i32
    %2 = arith.minsi %1, %c0_i32 : i32
    %c0_i32_0 = arith.constant 0 : i32
    %c0_i32_1 = arith.constant 0 : i32
    return %2, %c0_i32_0 : i32, i32
  }
  func.func @transform_3(%arg0: i32, %arg1: i32) -> (i32, i32) {
    %c0_i32 = arith.constant 0 : i32
    %c0_i32_0 = arith.constant 0 : i32
    %c0_i32_1 = arith.constant 0 : i32
    return %c0_i32, %c0_i32_0 : i32, i32
  }
  func.func @transform_4(%arg0: i32, %arg1: i32) -> (i32, i32) {
    %c1_i32 = arith.constant 1 : i32
    %0 = arith.muli %arg0, %c1_i32 : i32
    %1 = arith.addi %0, %arg1 : i32
    %c0_i32 = arith.constant 0 : i32
    %2 = arith.minsi %1, %c0_i32 : i32
    %c0_i32_0 = arith.constant 0 : i32
    %c0_i32_1 = arith.constant 0 : i32
    return %2, %c0_i32_0 : i32, i32
  }
  func.func @transform_5(%arg0: i32, %arg1: i32) -> (i32, i32, i32) {
    %c0_i32 = arith.constant 0 : i32
    %c0_i32_0 = arith.constant 0 : i32
    %c0_i32_1 = arith.constant 0 : i32
    return %arg0, %c0_i32, %c0_i32_0 : i32, i32, i32
  }
}

</mosaic_0001>

<llo_original>
// kernel: clip_adapter_loss_v2.1
$region0: #{clip_adapter_loss_v2.1}
  #allocation0 [shape = 'u32[]', space=smem, size = 0x4, offset = 0x4, fixed_abs, tag = 'smem constant byte address 0x4 - core index']
  #allocation1 [shape = 'u32[144,128]{1,0:T(1,128)}', space=vmem, size = 0x12000, scoped, tag = 'internal scratch']
  #allocation2 [shape = 'f32[1,1]{1,0:T(1,128)}', space=vmem, size = 0x200, scoped, tag = 'scratch operand']
  %s0 = inlined_call_operand.vmem [shape: f32[1,128], index: 0, kind: input, shape index: {}]
  %s1 = inlined_call_operand.vmem [shape: f32[1,128], index: 1, kind: input, shape index: {}]
  %s2 = inlined_call_operand.vmem [shape: f32[8,1], index: 2, kind: input, shape index: {}]
  %s3 = inlined_call_operand.vmem [shape: f32[1,8], index: 3, kind: input, shape index: {}]
  %s4 = inlined_call_operand.vmem [shape: f32[8,8], index: 4, kind: input, shape index: {}]
  %s5 = inlined_call_operand.hbm [shape: f32[1,1,1], index: 5, kind: output, shape index: {}]
  %s6 = sld [smem:[#allocation0]]
  $region38: #{clip_adapter_loss_v2.1} parent=0
    _
  %s8 = ssub.s32 1, %s6
  %s9 = scalar_select 0, %s8, %s6
  $region1: #{clip_adapter_loss_v2.1} parent=0
    #allocation3 [shape = 'u8[512]{0}', space=vmem, size = 0x400, scoped, tag = 'output window, operand 0, single buffered']
    #allocation4 [shape = 's32[1]{0}', space=sflag, size = 0x4, scoped, tag = 'scoped memory for clip_adapter_loss_v2.1']
    %10 = vsyncpa [#allocation4], 0
    // Predicated region
    $region2: #{clip_adapter_loss_v2.1} parent=1 // pred_check
      _
    $region3: #{clip_adapter_loss_v2.1} parent=1 // pred_check_branch
      %12 = sbr.rel (0) target = $region5
    $region4: #{clip_adapter_loss_v2.1} parent=1 // pred_region
      _
    $region5: #{clip_adapter_loss_v2.1} parent=1 // pred_fallthru
      _
    // Predicated region
    $region6: #{clip_adapter_loss_v2.1} parent=1 // pred_check
      _
    $region7: #{clip_adapter_loss_v2.1} parent=1 // pred_check_branch
      %14 = sbr.rel (0) target = $region9
    $region8: #{clip_adapter_loss_v2.1} parent=1 // pred_region
      _
    $region9: #{clip_adapter_loss_v2.1} parent=1 // pred_fallthru
      _
    // Predicated region
    $region10: #{clip_adapter_loss_v2.1} parent=1 // pred_check
      _
    $region11: #{clip_adapter_loss_v2.1} parent=1 // pred_check_branch
      %16 = sbr.rel (0) target = $region13
    $region12: #{clip_adapter_loss_v2.1} parent=1 // pred_region
      %s17 = sadd.s32 0, 0
      %p18 = scmp.lt.s32.totalorder %s17, 0
      %s19 = scalar_select %p18, %s17, 0
      %p20 = scmp.lt.s32.totalorder %s19, 0
      %s21 = scalar_select %p20, %s19, 0
      %s22 = smul.addr %s21, 8
      %s23 = scalar_lea.vmem %s2, %s22
      %s24 = sadd.s32 0, 0
      %p25 = scmp.lt.s32.totalorder %s24, 0
      %s26 = scalar_select %p25, %s24, 0
    $region13: #{clip_adapter_loss_v2.1} parent=1 // pred_fallthru
      _
    // Predicated region
    $region14: #{clip_adapter_loss_v2.1} parent=1 // pred_check
      _
    $region15: #{clip_adapter_loss_v2.1} parent=1 // pred_check_branch
      %28 = sbr.rel (0) target = $region17
    $region16: #{clip_adapter_loss_v2.1} parent=1 // pred_region
      _
    $region17: #{clip_adapter_loss_v2.1} parent=1 // pred_fallthru
      _
    // Predicated region
    $region18: #{clip_adapter_loss_v2.1} parent=1 // pred_check
      _
    $region19: #{clip_adapter_loss_v2.1} parent=1 // pred_check_branch
      %30 = sbr.rel (0) target = $region21
    $region20: #{clip_adapter_loss_v2.1} parent=1 // pred_region
      %s31 = sadd.s32 0, 0
      %p32 = scmp.lt.s32.totalorder %s31, 0
      %s33 = scalar_select %p32, %s31, 0
      %p34 = scmp.lt.s32.totalorder %s33, 0
      %s35 = scalar_select %p34, %s33, 0
      %s36 = smul.addr %s35, 8
      %s37 = scalar_lea.vmem %s4, %s36
      %s38 = sadd.s32 0, 0
      %p39 = scmp.lt.s32.totalorder %s38, 0
      %s40 = scalar_select %p39, %s38, 0
    $region21: #{clip_adapter_loss_v2.1} parent=1 // pred_fallthru
      _
    %s41 = sadd.s32 0, 0
    %p42 = scmp.lt.s32.totalorder %s41, 0
    %s43 = scalar_select %p42, %s41, 0
    %p44 = scmp.lt.s32.totalorder %s43, 0
    %s45 = scalar_select %p44, %s43, 0
    %s46 = smul.addr %s45, 8
    %s47 = scalar_lea.vmem %s2, %s46
    %s48 = sadd.s32 0, 0
    %p49 = scmp.lt.s32.totalorder %s48, 0
    %s50 = scalar_select %p49, %s48, 0
    %p51 = scmp.lt.s32.totalorder %s50, 0
    %s52 = scalar_select %p51, %s50, 0
    %s53 = smul.addr %s52, 8
    %s54 = scalar_lea.vmem %s4, %s53
    %s55 = sadd.s32 0, 0
    %p56 = scmp.lt.s32.totalorder %s55, 0
    %s57 = scalar_select %p56, %s55, 0
    %p58 = scmp.lt.s32.totalorder %s57, 0
    %s59 = scalar_select %p58, %s57, 0
    %s60 = smul.addr %s59, 8
    %s61 = scalar_lea.vmem %s2, %s60
    %s62 = sadd.s32 0, 0
    %p63 = scmp.lt.s32.totalorder %s62, 0
    %s64 = scalar_select %p63, %s62, 0
    %s65 = sadd.s32 0, 0
    %p66 = scmp.lt.s32.totalorder %s65, 0
    %s67 = scalar_select %p66, %s65, 0
    %p68 = scmp.lt.s32.totalorder %s67, 0
    %s69 = scalar_select %p68, %s67, 0
    %s70 = smul.addr %s69, 8
    %s71 = scalar_lea.vmem %s4, %s70
    %s72 = sadd.s32 0, 0
    %p73 = scmp.lt.s32.totalorder %s72, 0
    %s74 = scalar_select %p73, %s72, 0
    %p75 = scmp.eq.s32.totalorder 0, 0
    // Predicated region
    $region22: #{clip_adapter_loss_v2.1} parent=1 // pred_check
      %p76 = pneg %p75
    $region23: #{clip_adapter_loss_v2.1} parent=1 // pred_check_branch
      %78 = sbr.rel (%p76) target = $region25
    $region24: #{clip_adapter_loss_v2.1} parent=1 // pred_region
      %vm79 = vcmask 0
      %80 = vst.msk [vmem:[#allocation2] sm:$0x1] %vm79, 0.0
    $region25: #{clip_adapter_loss_v2.1} parent=1 // pred_fallthru
      _
    %v81 = vld [vmem:[%s71] sm:$0xff]
    %v82 = vld [vmem:[%s61] sm:$0xff]
    %v83 = vld [vmem:[%s3] sm:$0x1]
    %85 = vset.pattern.permute.xlu0 0
    %86 = vperm.xlu0 %85, %v82
    %v87 = vpop.permute.xlu0 %86
    %v90 = vlaneseq
    %v91 = vshrl.u32 %v90, 7
    %v92 = vsub.s32 0, %v91
    %v93 = vrot.slane %v83, %v92
    %vm95 = vcmp.gt.f32.partialorder %v87, %v93
    %v96 = vsel %vm95, %v81, 0.0
    %v97 = vmax.f32 %v81, 0.0
    %v98 = vsub.f32 %v97, %v96
    %v99 = vand.u32 2147483647, %v81
    %v100 = vsub.f32 0.0, %v99
    %v101 = vmul.f32 %v100, 1.442695
    %v102 = vpow.pop %v101
    %v103 = vadd.f32 %v102, 1.0
    %v104 = vlog2.pop %v103
    %v105 = vmul.f32 %v104, 0.6931472
    %v106 = vmul.f32 -0.5, %v102
    %v107 = vadd.f32 %v106, 1.0
    %v108 = vmul.f32 %v107, %v102
    %v109 = vand.u32 2147483647, %v102
    %vm110 = vcmp.lt.f32.partialorder %v109, 0.0004427343
    %v111 = vsel %vm110, %v108, %v105
    %v112 = vadd.f32 %v98, %v111
    %vm113 = vcmask 64512
    %v114 = vsel %vm113, %v112, 0.0
    %115 = vadd.xlane.f32.xlu0 %v114
    %v116 = vpop.xlane.xlu0 %115
    %s117 = sadd.s32 0, 0
    %s118 = smul.u32 %s117, 8
    %v119 = vlaneseq
    %v120 = vshrl.u32 %v119, 7
    %v121 = vstv %s118
    %v122 = vadd.s32 %v121, %v120
    %vm123 = vcmp.lt.s32.totalorder %v122, 8
    %v124 = vsel %vm123, %v116, 0.0
    %v125 = vld [vmem:[#allocation2] sm:$0x1]
    %vm126 = vcmask 7168
    %v127 = vsel %vm126, %v124, 0.0
    %128 = vadd.xlane.f32.xlu0 %v127
    %v129 = vpop.xlane.xlu0 %128
    %v130 = vrot.slane %v129, 4
    %v131 = vadd.f32 %v129, %v130
    %v132 = vrot.slane %v131, 2
    %v133 = vadd.f32 %v131, %v132
    %v134 = vrot.slane %v133, 1
    %v135 = vadd.f32 %v133, %v134
    %s136 = vtos %v135
    %s137 = smul.f32 %s136, 0.015625
    %v138 = vstv %s137
    %v139 = vadd.f32 %v125, %v138
    %vm140 = vcmask 0
    %141 = vst.msk [vmem:[#allocation2] sm:$0x1] %vm140, %v139
    // Predicated region
    $region26: #{clip_adapter_loss_v2.1} parent=1 // pred_check
      %p142 = pneg %p75
    $region27: #{clip_adapter_loss_v2.1} parent=1 // pred_check_branch
      %144 = sbr.rel (%p142) target = $region29
    $region28: #{clip_adapter_loss_v2.1} parent=1 // pred_region
      %v145 = vld [vmem:[#allocation2] sm:$0x1]
      %v146 = vld [vmem:[%s0] sm:$0x1]
      %v147 = vld [vmem:[%s1] sm:$0x1]
      %v148 = vlaneseq
      %v149 = vand.u32 %v148, 127
      %v150 = vmul.u32 %v120, 128
      %v151 = vadd.s32 %v150, %v149
      %vm152 = vcmp.lt.s32.totalorder %v151, 8
      %vm153 = vcmp.ne.f32.partialorder %v147, 0.0
      %v154 = vsel %vm153, %v146, 0.0
      %v155 = vmax.f32 %v146, 0.0
      %v156 = vsub.f32 %v155, %v154
      %v157 = vand.u32 2147483647, %v146
      %v158 = vsub.f32 0.0, %v157
      %v159 = vmul.f32 %v158, 1.442695
      %v160 = vpow.pop %v159
      %v161 = vadd.f32 %v160, 1.0
      %v162 = vlog2.pop %v161
      %v163 = vmul.f32 %v162, 0.6931472
      %v164 = vmul.f32 -0.5, %v160
      %v165 = vadd.f32 %v164, 1.0
      %v166 = vmul.f32 %v165, %v160
      %v167 = vand.u32 2147483647, %v160
      %vm168 = vcmp.lt.f32.partialorder %v167, 0.0004427343
      %v169 = vsel %vm168, %v166, %v163
      %v170 = vadd.f32 %v156, %v169
      %v171 = vsel %vm152, %v170, 0.0
      %vm172 = vcmask 1040384
      %v173 = vsel %vm172, %v171, 0.0
      %174 = vadd.xlane.f32.xlu0 %v173
      %v175 = vpop.xlane.xlu0 %174
      %v176 = vrot.slane %v175, 4
      %v177 = vadd.f32 %v175, %v176
      %v178 = vrot.slane %v177, 2
      %v179 = vadd.f32 %v177, %v178
      %v180 = vrot.slane %v179, 1
      %v181 = vadd.f32 %v179, %v180
      %s182 = vtos %v181
      %s183 = smul.f32 %s182, 0.125
      %v184 = vstv %s183
      %v185 = vadd.f32 %v184, 0.0
      %v186 = vsub.f32 %v146, %v147
      %v187 = vand.u32 2147483647, %v186
      %vm188 = vcmp.lt.f32.partialorder %v187, 1.0
      %v189 = vmul.f32 %v186, 0.5
      %v190 = vmul.f32 %v189, %v186
      %v191 = vsub.f32 %v187, 0.5
      %v192 = vsel %vm188, %v190, %v191
      %v193 = vsel %vm152, %v192, 0.0
      %v194 = vsel %vm172, %v193, 0.0
      %195 = vadd.xlane.f32.xlu0 %v194
      %v196 = vpop.xlane.xlu0 %195
      %v197 = vrot.slane %v196, 4
      %v198 = vadd.f32 %v196, %v197
      %v199 = vrot.slane %v198, 2
      %v200 = vadd.f32 %v198, %v199
      %v201 = vrot.slane %v200, 1
      %v202 = vadd.f32 %v200, %v201
      %s203 = vtos %v202
      %v204 = vrcp.pop 8.0
      %s205 = vtos %v204
      %s206 = smul.f32 %s203, %s205
      %v207 = vstv %s206
      %v208 = vadd.f32 %v207, 1.0
      %v209 = vlog2.pop %v208
      %v210 = vmul.f32 %v209, 0.6931472
      %v211 = vmul.f32 -0.5, %v207
      %v212 = vadd.f32 %v211, 1.0
      %v213 = vmul.f32 %v212, %v207
      %v214 = vand.u32 2147483647, %v207
      %vm215 = vcmp.lt.f32.partialorder %v214, 0.0004427343
      %v216 = vsel %vm215, %v213, %v210
      %s217 = vtos %v216
      %s218 = smul.f32 %s217, 0.2
      %v219 = vstv %s218
      %v220 = vadd.f32 %v185, %v219
      %p221 = scmp.eq.s32.totalorder 0, 0
      %s222 = scalar_select %p221, 1.0, 0.0
      %v223 = vstv %s222
      %v224 = vmul.f32 %v223, %v220
      %v225 = vadd.f32 %v145, %v224
      %226 = vst.msk [vmem:[#allocation3] sm:$0x1] %vm140, %v225
    $region29: #{clip_adapter_loss_v2.1} parent=1 // pred_fallthru
      _
    // Predicated region
    $region30: #{clip_adapter_loss_v2.1} parent=1 // pred_check
      _
    $region31: #{clip_adapter_loss_v2.1} parent=1 // pred_check_branch
      %228 = sbr.rel (0) target = $region33
    $region32: #{clip_adapter_loss_v2.1} parent=1 // pred_region
      %s230 = ssub.s32 16, 16
      %231 = vsyncadd [#allocation4], %s230
      %s233 = sshll.u32 [#allocation3], 4
      %s234 = int_to_ptr.vmem [resolvable:$true] %s233
      %236 = dma.vmem_to_hbm [thread:$0]  %s234, 16, %s5, [#allocation4]
    $region33: #{clip_adapter_loss_v2.1} parent=1 // pred_fallthru
      _
    // Predicated region
    $region34: #{clip_adapter_loss_v2.1} parent=1 // pred_check
      _
    $region35: #{clip_adapter_loss_v2.1} parent=1 // pred_check_branch
      %238 = sbr.rel (0) target = $region37
    $region36: #{clip_adapter_loss_v2.1} parent=1 // pred_region
      %239 = dma.done [#allocation4], 16
    $region37: #{clip_adapter_loss_v2.1} parent=1 // pred_fallthru
      _
    %240 = vsyncpa [#allocation4], 1

</llo_original>
